<compile_context>
chip_gen: v7x
topology: tpu7x:2x2x1
jax: 0.10.0
libtpu: 0.0.40
codegen_flags: <defaults>
</compile_context>

<pallas_src>
import functools

import jax
import jax.numpy as jnp
from jax.experimental import pallas as pl
from jax.experimental.pallas import tpu as pltpu

NUM_CHARACTERS = 32
NUM_ACTION_STATES = 383
STATE_SIZE = 10
NUM_STAGES = 32
PLAYER_OUT = 29
STAGE_DIM = 6
GAME_OUT = 64

# concatenated input feature size: [char0, as0, state0, char1, as1, state1, stage]
D_IN = 2 * (NUM_CHARACTERS + NUM_ACTION_STATES + STATE_SIZE) + NUM_STAGES  # 882

_NEG = jnp.float32(-1e30)


def _round_up(n, m):
    return ((n + m - 1) // m) * m


# --------------------------------------------------------------------------
# Kernel: one fused matmul + log_softmax + Gumbel-max categorical sample.
# Padded logit lanes already carry -1e30 through the folded bias, so no
# in-kernel validity masks are needed.
# --------------------------------------------------------------------------
def _actor_kernel(x_ref, w_ref, b_ref, g_ref, out_ref):
    logits = (jnp.dot(x_ref[...], w_ref[...], preferred_element_type=jnp.float32)
              + b_ref[...])                                        # (1, A_pad)

    # log_softmax (padded lanes contribute exp(~-1e30) == 0 to the denominator)
    m = jnp.max(logits, axis=1, keepdims=True)
    shifted = logits - m
    denom = jnp.sum(jnp.exp(shifted), axis=1, keepdims=True)
    lsm = shifted - jnp.log(denom)

    # Categorical(logits=lsm).sample() via Gumbel-max (host-generated noise).
    z = lsm + g_ref[...]
    zmax = jnp.max(z, axis=1, keepdims=True)
    col = jax.lax.broadcasted_iota(jnp.int32, z.shape, 1)
    sel = jnp.where(z >= zmax, col, jnp.int32(2147483647))
    out_ref[...] = jnp.min(sel, axis=1, keepdims=True)             # (1, 1) int32


@jax.jit
def actor_forward(x_packed, w_folded, b_folded, gumbel):
    out = pl.pallas_call(
        _actor_kernel,
        out_shape=jax.ShapeDtypeStruct((1, 1), jnp.int32),
        in_specs=[pl.BlockSpec(memory_space=pltpu.MemorySpace.VMEM)] * 4,
        out_specs=pl.BlockSpec(memory_space=pltpu.MemorySpace.VMEM),
    )(x_packed, w_folded, b_folded, gumbel)
    return out[0, 0]  # scalar action index, mirrors `.sample()[0]`


# --------------------------------------------------------------------------
# Deterministic parameter construction (shapes from the PyTorch __init__)
# --------------------------------------------------------------------------
class KeyGen:
    def __init__(self, key):
        self._key = key

    def __call__(self):
        self._key, sub = jax.random.split(self._key)
        return sub


def init_linear(kg, n_in, n_out):
    w = jax.random.normal(kg(), (n_in, n_out), jnp.float32) * (n_in ** -0.5)
    b = jax.random.normal(kg(), (1, n_out), jnp.float32) * 0.01
    return w, b


def player_params(kg):
    return dict(
        c1=init_linear(kg, NUM_CHARACTERS, 32),
        c2=init_linear(kg, 32, 10),
        a1=init_linear(kg, NUM_ACTION_STATES, 64),
        a2=init_linear(kg, 64, 32),
        p1=init_linear(kg, 10 + 32 + STATE_SIZE, 64),
        p2=init_linear(kg, 64, PLAYER_OUT),
    )


def actor_params(kg, action_dim):
    return dict(
        p0=player_params(kg),
        p1=player_params(kg),
        s1=init_linear(kg, NUM_STAGES, 32),
        s2=init_linear(kg, 32, STAGE_DIM),
        g1=init_linear(kg, 2 * PLAYER_OUT + STAGE_DIM, 128),
        g2=init_linear(kg, 128, GAME_OUT),
        pol=init_linear(kg, GAME_OUT, action_dim),
    )


# --------------------------------------------------------------------------
# Host-side folding: compose the purely-affine network into one (D_IN, A) map
# --------------------------------------------------------------------------
def _fold_player(pp):
    (cw1, cb1), (cw2, cb2) = pp["c1"], pp["c2"]
    (aw1, ab1), (aw2, ab2) = pp["a1"], pp["a2"]
    (pw1, pb1), (pw2, pb2) = pp["p1"], pp["p2"]
    w_c = cw1 @ cw2                       # (32, 10)
    b_c = cb1 @ cw2 + cb2                 # (1, 10)
    w_a = aw1 @ aw2                       # (383, 32)
    b_a = ab1 @ aw2 + ab2                 # (1, 32)
    pw1c, pw1a, pw1s = pw1[:10], pw1[10:42], pw1[42:52]
    w_char = w_c @ pw1c @ pw2             # (32, 29)
    w_as = w_a @ pw1a @ pw2               # (383, 29)
    w_state = pw1s @ pw2                  # (10, 29)
    b_p = (b_c @ pw1c + b_a @ pw1a + pb1) @ pw2 + pb2   # (1, 29)
    return w_char, w_as, w_state, b_p


def fold_actor_params(p, action_dim):
    w0c, w0a, w0s, b0 = _fold_player(p["p0"])
    w1c, w1a, w1s, b1 = _fold_player(p["p1"])
    (sw1, sb1), (sw2, sb2) = p["s1"], p["s2"]
    w_stage = sw1 @ sw2                   # (32, 6)
    b_stage = sb1 @ sw2 + sb2             # (1, 6)
    (gw1, gb1), (gw2, gb2) = p["g1"], p["g2"]
    polw, polb = p["pol"]
    gw1p0, gw1p1, gw1s = gw1[:29], gw1[29:58], gw1[58:64]
    tail = gw2 @ polw                     # (128, A)
    W = jnp.concatenate([
        w0c @ gw1p0 @ tail,               # (32, A)  x_char0
        w0a @ gw1p0 @ tail,               # (383, A) x_action_state0
        w0s @ gw1p0 @ tail,               # (10, A)  x_state0
        w1c @ gw1p1 @ tail,               # (32, A)  x_char1
        w1a @ gw1p1 @ tail,               # (383, A) x_action_state1
        w1s @ gw1p1 @ tail,               # (10, A)  x_state1
        w_stage @ gw1s @ tail,            # (32, A)  x_stage
    ], axis=0)                            # (882, A)
    b = ((b0 @ gw1p0 + b1 @ gw1p1 + b_stage @ gw1s + gb1) @ tail
         + gb2 @ polw + polb)             # (1, A)

    d_pad = _round_up(W.shape[0], 128)    # 896
    a_pad = _round_up(max(action_dim, 1), 128)
    W = jnp.pad(W, ((0, d_pad - W.shape[0]), (0, a_pad - action_dim)))
    # Bake the invalid-lane mask into the bias: padded logit lanes -> -1e30.
    b = jnp.pad(b, ((0, 0), (0, a_pad - action_dim)),
                constant_values=float(_NEG))
    return W, b, d_pad, a_pad


def pack_inputs(inputs, d_pad):
    x = jnp.concatenate(inputs, axis=1)   # (1, 882)
    return jnp.pad(x, ((0, 0), (0, d_pad - x.shape[1])))


def make_gumbel(key, action_dim, a_pad):
    g = jax.random.gumbel(key, (1, action_dim), jnp.float32)
    # Padded lanes get 0 noise (their logits are already ~-1e30, never selected).
    return jnp.pad(g, ((0, 0), (0, a_pad - action_dim)))


# --------------------------------------------------------------------------
# Pure-JAX unfused reference (validates the host-side folding + sampling)
# --------------------------------------------------------------------------
def reference_action(params, inputs, gumbel, action_dim):
    def lin(x, wb):
        w, b = wb
        return x @ w + b

    def player(pp, xc, xa, xs):
        c = lin(lin(xc, pp["c1"]), pp["c2"])
        a = lin(lin(xa, pp["a1"]), pp["a2"])
        return lin(lin(jnp.concatenate([c, a, xs], axis=1), pp["p1"]), pp["p2"])

    o0 = player(params["p0"], *inputs[0:3])
    o1 = player(params["p1"], *inputs[3:6])
    st = lin(lin(inputs[6], params["s1"]), params["s2"])
    g = lin(lin(jnp.concatenate([o0, o1, st], axis=1), params["g1"]), params["g2"])
    logits = lin(g, params["pol"])
    lsm = jax.nn.log_softmax(logits, axis=1)
    return int(jnp.argmax(lsm + gumbel[:, :action_dim], axis=1)[0])


# --------------------------------------------------------------------------
# Demo
# --------------------------------------------------------------------------
if __name__ == "__main__":
    action_dim = 8
    kg = KeyGen(jax.random.PRNGKey(0))

    params = actor_params(kg, action_dim)
    W, b, d_pad, a_pad = fold_actor_params(params, action_dim)

    def one_hot(n):
        i = jax.random.randint(kg(), (), 0, n)
        return jax.nn.one_hot(i, n, dtype=jnp.float32)[None, :]

    # one game: player0 = (character, action_state, state), same for player1, plus stage
    x_char0 = one_hot(NUM_CHARACTERS)                           # (1, 32)
    x_as0 = one_hot(NUM_ACTION_STATES)                          # (1, 383)
    x_state0 = jax.random.normal(kg(), (1, STATE_SIZE), jnp.float32)
    x_char1 = one_hot(NUM_CHARACTERS)
    x_as1 = one_hot(NUM_ACTION_STATES)
    x_state1 = jax.random.normal(kg(), (1, STATE_SIZE), jnp.float32)
    x_stage = one_hot(NUM_STAGES)                               # (1, 32)

    inputs = (x_char0, x_as0, x_state0, x_char1, x_as1, x_state1, x_stage)
    x_packed = pack_inputs(inputs, d_pad)                       # (1, 896)

    # host-generated Gumbel noise for the categorical sample
    gumbel = make_gumbel(kg(), action_dim, a_pad)               # (1, 128)

    action = actor_forward(x_packed, W, b, gumbel)
    action = jax.block_until_ready(action)

    assert action.dtype == jnp.int32
    assert 0 <= int(action) < action_dim
    # folded kernel must agree with the unfused reference (same Gumbel noise)
    assert int(action) == reference_action(params, inputs, gumbel, action_dim)
    print("KERNEL_OK")
</pallas_src>

<mosaic_0001>
module attributes {stable_mosaic.version = 11 : i64} {
  func.func @_actor_kernel(%arg0: memref<1x896xf32, #tpu.memory_space<vmem>>, %arg1: memref<896x128xf32, #tpu.memory_space<vmem>>, %arg2: memref<1x128xf32, #tpu.memory_space<vmem>>, %arg3: memref<1x128xf32, #tpu.memory_space<vmem>>, %arg4: memref<1x1xi32, #tpu.memory_space<vmem>>) attributes {dimension_semantics = [], scalar_prefetch = 0 : i64, scratch_operands = 0 : i64, tpu.core_type = #tpu.core_type<tc>} {
    %c0 = arith.constant 0 : index
    %c0_0 = arith.constant 0 : index
    %0 = vector.load %arg0[%c0, %c0_0] : memref<1x896xf32, #tpu.memory_space<vmem>>, vector<1x896xf32>
    %c0_1 = arith.constant 0 : index
    %c0_2 = arith.constant 0 : index
    %1 = vector.load %arg1[%c0_1, %c0_2] : memref<896x128xf32, #tpu.memory_space<vmem>>, vector<896x128xf32>
    %cst = arith.constant dense<0.000000e+00> : vector<1x128xf32>
    %2 = tpu.matmul %0, %1, %cst {dimension_numbers = #tpu.dot_dimension_numbers<[1], [0], [0], [1], [0, 0, 1, 1], [], []>} : vector<1x896xf32>, vector<896x128xf32>, vector<1x128xf32> -> vector<1x128xf32>
    %c0_3 = arith.constant 0 : index
    %c0_4 = arith.constant 0 : index
    %3 = vector.load %arg2[%c0_3, %c0_4] : memref<1x128xf32, #tpu.memory_space<vmem>>, vector<1x128xf32>
    %4 = arith.addf %2, %3 : vector<1x128xf32>
    %cst_5 = arith.constant dense<0xFF800000> : vector<1xf32>
    %5 = vector.multi_reduction <maximumf>, %4, %cst_5 [1] : vector<1x128xf32> to vector<1xf32>
    %6 = vector.shape_cast %5 : vector<1xf32> to vector<1x1xf32>
    %7 = vector.broadcast %6 : vector<1x1xf32> to vector<1x128xf32>
    %8 = arith.subf %4, %7 : vector<1x128xf32>
    %9 = math.exp %8 : vector<1x128xf32>
    %cst_6 = arith.constant dense<0.000000e+00> : vector<1xf32>
    %10 = vector.multi_reduction <add>, %9, %cst_6 [1] : vector<1x128xf32> to vector<1xf32>
    %11 = vector.shape_cast %10 : vector<1xf32> to vector<1x1xf32>
    %12 = math.log %11 : vector<1x1xf32>
    %13 = vector.broadcast %12 : vector<1x1xf32> to vector<1x128xf32>
    %14 = arith.subf %8, %13 : vector<1x128xf32>
    %c0_7 = arith.constant 0 : index
    %c0_8 = arith.constant 0 : index
    %15 = vector.load %arg3[%c0_7, %c0_8] : memref<1x128xf32, #tpu.memory_space<vmem>>, vector<1x128xf32>
    %16 = arith.addf %14, %15 : vector<1x128xf32>
    %cst_9 = arith.constant dense<0xFF800000> : vector<1xf32>
    %17 = vector.multi_reduction <maximumf>, %16, %cst_9 [1] : vector<1x128xf32> to vector<1xf32>
    %18 = vector.shape_cast %17 : vector<1xf32> to vector<1x1xf32>
    %19 = tpu.iota {dimensions = array<i32: 1>} : vector<1x128xi32>
    %20 = vector.broadcast %18 : vector<1x1xf32> to vector<1x128xf32>
    %21 = arith.cmpf oge, %16, %20 : vector<1x128xf32>
    %c2147483647_i32 = arith.constant 2147483647 : i32
    %22 = vector.broadcast %c2147483647_i32 : i32 to vector<1x128xi32>
    %23 = arith.select %21, %19, %22 : vector<1x128xi1>, vector<1x128xi32>
    %cst_10 = arith.constant dense<2147483647> : vector<1xi32>
    %24 = vector.multi_reduction <minsi>, %23, %cst_10 [1] : vector<1x128xi32> to vector<1xi32>
    %25 = vector.shape_cast %24 : vector<1xi32> to vector<1x1xi32>
    %c0_11 = arith.constant 0 : index
    %c0_12 = arith.constant 0 : index
    %26 = vector.load %arg4[%c0_11, %c0_12] : memref<1x1xi32, #tpu.memory_space<vmem>>, vector<1x1xi32>
    tpu.vector_store %arg4[%c0_11, %c0_12], %25 {strides = array<i32>} : memref<1x1xi32, #tpu.memory_space<vmem>>, vector<1x1xi32>,
    return
  }
}

</mosaic_0001>

<llo_original>
// kernel: actor_forward.1
$region0: #{actor_forward.1}
  #allocation0 [shape = 'u32[]', space=smem, size = 0x4, offset = 0x4, fixed_abs, tag = 'smem constant byte address 0x4 - core index']
  #allocation1 [shape = 'u32[144,128]{1,0:T(1,128)}', space=vmem, size = 0x12000, scoped, tag = 'internal scratch']
  %s0 = inlined_call_operand.hbm [shape: f32[1,896], index: 0, kind: input, shape index: {}]
  %s1 = inlined_call_operand.hbm [shape: f32[896,128], index: 1, kind: input, shape index: {}]
  %s2 = inlined_call_operand.vmem [shape: f32[1,128], index: 2, kind: input, shape index: {}]
  %s3 = inlined_call_operand.vmem [shape: f32[1,128], index: 3, kind: input, shape index: {}]
  %s4 = inlined_call_operand.hbm [shape: s32[1,1], index: 4, kind: output, shape index: {}]
  %s5 = sld [smem:[#allocation0]]
  $region34: #{actor_forward.1} parent=0
    _
  %s7 = ssub.s32 1, %s5
  %s8 = scalar_select 0, %s7, %s5
  $region1: #{actor_forward.1} parent=0
    #allocation2 [shape = 'u8[3584]{0}', space=vmem, size = 0x1000, scoped, tag = 'input window, operand 0, single buffered']
    #allocation3 [shape = 's32[1]{0}', space=sflag, size = 0x4, scoped, tag = 'scoped memory for actor_forward.1']
    #allocation4 [shape = 's32[1]{0}', space=sflag, size = 0x4, scoped, tag = 'scoped memory for actor_forward.1']
    #allocation5 [shape = 'u8[458752]{0}', space=vmem, size = 0x70000, scoped, tag = 'input window, operand 1, single buffered']
    #allocation6 [shape = 's32[1]{0}', space=sflag, size = 0x4, scoped, tag = 'scoped memory for actor_forward.1']
    #allocation7 [shape = 'u8[512]{0}', space=vmem, size = 0x400, scoped, tag = 'output window, operand 0, single buffered']
    %9 = vsyncpa [#allocation3], 0
    %10 = vsyncpa [#allocation6], 0
    %11 = vsyncpa [#allocation4], 0
    // Predicated region
    $region2: #{actor_forward.1} parent=1 // pred_check
      _
    $region3: #{actor_forward.1} parent=1 // pred_check_branch
      %13 = sbr.rel (0) target = $region5
    $region4: #{actor_forward.1} parent=1 // pred_region
      %s15 = ssub.s32 112, 112
      %16 = vsyncadd [#allocation3], %s15
      %s18 = sshll.u32 [#allocation2], 4
      %s19 = int_to_ptr.vmem [resolvable:$true] %s18
      %21 = dma.hbm_to_vmem [thread:$0]  %s0, 112, %s19, [#allocation3]
    $region5: #{actor_forward.1} parent=1 // pred_fallthru
      _
    // Predicated region
    $region6: #{actor_forward.1} parent=1 // pred_check
      _
    $region7: #{actor_forward.1} parent=1 // pred_check_branch
      %23 = sbr.rel (0) target = $region9
    $region8: #{actor_forward.1} parent=1 // pred_region
      %s25 = ssub.s32 14336, 14336
      %26 = vsyncadd [#allocation6], %s25
      %s27 = sshll.u32 [#allocation5], 4
      %s28 = int_to_ptr.vmem [resolvable:$true] %s27
      %33 = dma.hbm_to_vmem [thread:$0]  %s1, 14336, %s28, [#allocation6], 128, 128, 8
    $region9: #{actor_forward.1} parent=1 // pred_fallthru
      _
    // Predicated region
    $region10: #{actor_forward.1} parent=1 // pred_check
      _
    $region11: #{actor_forward.1} parent=1 // pred_check_branch
      %35 = sbr.rel (0) target = $region13
    $region12: #{actor_forward.1} parent=1 // pred_region
      _
    $region13: #{actor_forward.1} parent=1 // pred_fallthru
      _
    // Predicated region
    $region14: #{actor_forward.1} parent=1 // pred_check
      _
    $region15: #{actor_forward.1} parent=1 // pred_check_branch
      %37 = sbr.rel (0) target = $region17
    $region16: #{actor_forward.1} parent=1 // pred_region
      _
    $region17: #{actor_forward.1} parent=1 // pred_fallthru
      _
    // Predicated region
    $region18: #{actor_forward.1} parent=1 // pred_check
      _
    $region19: #{actor_forward.1} parent=1 // pred_check_branch
      %39 = sbr.rel (0) target = $region21
    $region20: #{actor_forward.1} parent=1 // pred_region
      %40 = dma.done [#allocation3], 112
    $region21: #{actor_forward.1} parent=1 // pred_fallthru
      _
    // Predicated region
    $region22: #{actor_forward.1} parent=1 // pred_check
      _
    $region23: #{actor_forward.1} parent=1 // pred_check_branch
      %42 = sbr.rel (0) target = $region25
    $region24: #{actor_forward.1} parent=1 // pred_region
      %43 = dma.done [#allocation6], 14336
    $region25: #{actor_forward.1} parent=1 // pred_fallthru
      _
    %v44 = vld [vmem:[#allocation2] sm:$0xff]
    %v45 = vld [vmem:[#allocation5] sm:$0xff]
    %v46 = vld [vmem:[#allocation5 + $0x8] sm:$0xff]
    %v47 = vld [vmem:[#allocation5 + $0x10] sm:$0xff]
    %v48 = vld [vmem:[#allocation5 + $0x18] sm:$0xff]
    %v49 = vld [vmem:[#allocation5 + $0x20] sm:$0xff]
    %v50 = vld [vmem:[#allocation5 + $0x28] sm:$0xff]
    %v51 = vld [vmem:[#allocation5 + $0x30] sm:$0xff]
    %v52 = vld [vmem:[#allocation5 + $0x38] sm:$0xff]
    %v53 = vld [vmem:[#allocation5 + $0x40] sm:$0xff]
    %v54 = vld [vmem:[#allocation5 + $0x48] sm:$0xff]
    %v55 = vld [vmem:[#allocation5 + $0x50] sm:$0xff]
    %v56 = vld [vmem:[#allocation5 + $0x58] sm:$0xff]
    %v57 = vld [vmem:[#allocation5 + $0x60] sm:$0xff]
    %v58 = vld [vmem:[#allocation5 + $0x68] sm:$0xff]
    %v59 = vld [vmem:[#allocation5 + $0x70] sm:$0xff]
    %v60 = vld [vmem:[#allocation5 + $0x78] sm:$0xff]
    %v61 = vld [vmem:[#allocation5 + $0x80] sm:$0xff]
    %v62 = vld [vmem:[#allocation5 + $0x88] sm:$0xff]
    %v63 = vld [vmem:[#allocation5 + $0x90] sm:$0xff]
    %v64 = vld [vmem:[#allocation5 + $0x98] sm:$0xff]
    %v65 = vld [vmem:[#allocation5 + $0xa0] sm:$0xff]
    %v66 = vld [vmem:[#allocation5 + $0xa8] sm:$0xff]
    %v67 = vld [vmem:[#allocation5 + $0xb0] sm:$0xff]
    %v68 = vld [vmem:[#allocation5 + $0xb8] sm:$0xff]
    %v69 = vld [vmem:[#allocation5 + $0xc0] sm:$0xff]
    %v70 = vld [vmem:[#allocation5 + $0xc8] sm:$0xff]
    %v71 = vld [vmem:[#allocation5 + $0xd0] sm:$0xff]
    %v72 = vld [vmem:[#allocation5 + $0xd8] sm:$0xff]
    %v73 = vld [vmem:[#allocation5 + $0xe0] sm:$0xff]
    %v74 = vld [vmem:[#allocation5 + $0xe8] sm:$0xff]
    %v75 = vld [vmem:[#allocation5 + $0xf0] sm:$0xff]
    %v76 = vld [vmem:[#allocation5 + $0xf8] sm:$0xff]
    %v77 = vld [vmem:[#allocation5 + $0x100] sm:$0xff]
    %v78 = vld [vmem:[#allocation5 + $0x108] sm:$0xff]
    %v79 = vld [vmem:[#allocation5 + $0x110] sm:$0xff]
    %v80 = vld [vmem:[#allocation5 + $0x118] sm:$0xff]
    %v81 = vld [vmem:[#allocation5 + $0x120] sm:$0xff]
    %v82 = vld [vmem:[#allocation5 + $0x128] sm:$0xff]
    %v83 = vld [vmem:[#allocation5 + $0x130] sm:$0xff]
    %v84 = vld [vmem:[#allocation5 + $0x138] sm:$0xff]
    %v85 = vld [vmem:[#allocation5 + $0x140] sm:$0xff]
    %v86 = vld [vmem:[#allocation5 + $0x148] sm:$0xff]
    %v87 = vld [vmem:[#allocation5 + $0x150] sm:$0xff]
    %v88 = vld [vmem:[#allocation5 + $0x158] sm:$0xff]
    %v89 = vld [vmem:[#allocation5 + $0x160] sm:$0xff]
    %v90 = vld [vmem:[#allocation5 + $0x168] sm:$0xff]
    %v91 = vld [vmem:[#allocation5 + $0x170] sm:$0xff]
    %v92 = vld [vmem:[#allocation5 + $0x178] sm:$0xff]
    %v93 = vld [vmem:[#allocation5 + $0x180] sm:$0xff]
    %v94 = vld [vmem:[#allocation5 + $0x188] sm:$0xff]
    %v95 = vld [vmem:[#allocation5 + $0x190] sm:$0xff]
    %v96 = vld [vmem:[#allocation5 + $0x198] sm:$0xff]
    %v97 = vld [vmem:[#allocation5 + $0x1a0] sm:$0xff]
    %v98 = vld [vmem:[#allocation5 + $0x1a8] sm:$0xff]
    %v99 = vld [vmem:[#allocation5 + $0x1b0] sm:$0xff]
    %v100 = vld [vmem:[#allocation5 + $0x1b8] sm:$0xff]
    %v101 = vld [vmem:[#allocation5 + $0x1c0] sm:$0xff]
    %v102 = vld [vmem:[#allocation5 + $0x1c8] sm:$0xff]
    %v103 = vld [vmem:[#allocation5 + $0x1d0] sm:$0xff]
    %v104 = vld [vmem:[#allocation5 + $0x1d8] sm:$0xff]
    %v105 = vld [vmem:[#allocation5 + $0x1e0] sm:$0xff]
    %v106 = vld [vmem:[#allocation5 + $0x1e8] sm:$0xff]
    %v107 = vld [vmem:[#allocation5 + $0x1f0] sm:$0xff]
    %v108 = vld [vmem:[#allocation5 + $0x1f8] sm:$0xff]
    %v109 = vld [vmem:[#allocation5 + $0x200] sm:$0xff]
    %v110 = vld [vmem:[#allocation5 + $0x208] sm:$0xff]
    %v111 = vld [vmem:[#allocation5 + $0x210] sm:$0xff]
    %v112 = vld [vmem:[#allocation5 + $0x218] sm:$0xff]
    %v113 = vld [vmem:[#allocation5 + $0x220] sm:$0xff]
    %v114 = vld [vmem:[#allocation5 + $0x228] sm:$0xff]
    %v115 = vld [vmem:[#allocation5 + $0x230] sm:$0xff]
    %v116 = vld [vmem:[#allocation5 + $0x238] sm:$0xff]
    %v117 = vld [vmem:[#allocation5 + $0x240] sm:$0xff]
    %v118 = vld [vmem:[#allocation5 + $0x248] sm:$0xff]
    %v119 = vld [vmem:[#allocation5 + $0x250] sm:$0xff]
    %v120 = vld [vmem:[#allocation5 + $0x258] sm:$0xff]
    %v121 = vld [vmem:[#allocation5 + $0x260] sm:$0xff]
    %v122 = vld [vmem:[#allocation5 + $0x268] sm:$0xff]
    %v123 = vld [vmem:[#allocation5 + $0x270] sm:$0xff]
    %v124 = vld [vmem:[#allocation5 + $0x278] sm:$0xff]
    %v125 = vld [vmem:[#allocation5 + $0x280] sm:$0xff]
    %v126 = vld [vmem:[#allocation5 + $0x288] sm:$0xff]
    %v127 = vld [vmem:[#allocation5 + $0x290] sm:$0xff]
    %v128 = vld [vmem:[#allocation5 + $0x298] sm:$0xff]
    %v129 = vld [vmem:[#allocation5 + $0x2a0] sm:$0xff]
    %v130 = vld [vmem:[#allocation5 + $0x2a8] sm:$0xff]
    %v131 = vld [vmem:[#allocation5 + $0x2b0] sm:$0xff]
    %v132 = vld [vmem:[#allocation5 + $0x2b8] sm:$0xff]
    %v133 = vld [vmem:[#allocation5 + $0x2c0] sm:$0xff]
    %v134 = vld [vmem:[#allocation5 + $0x2c8] sm:$0xff]
    %v135 = vld [vmem:[#allocation5 + $0x2d0] sm:$0xff]
    %v136 = vld [vmem:[#allocation5 + $0x2d8] sm:$0xff]
    %v137 = vld [vmem:[#allocation5 + $0x2e0] sm:$0xff]
    %v138 = vld [vmem:[#allocation5 + $0x2e8] sm:$0xff]
    %v139 = vld [vmem:[#allocation5 + $0x2f0] sm:$0xff]
    %v140 = vld [vmem:[#allocation5 + $0x2f8] sm:$0xff]
    %v141 = vld [vmem:[#allocation5 + $0x300] sm:$0xff]
    %v142 = vld [vmem:[#allocation5 + $0x308] sm:$0xff]
    %v143 = vld [vmem:[#allocation5 + $0x310] sm:$0xff]
    %v144 = vld [vmem:[#allocation5 + $0x318] sm:$0xff]
    %v145 = vld [vmem:[#allocation5 + $0x320] sm:$0xff]
    %v146 = vld [vmem:[#allocation5 + $0x328] sm:$0xff]
    %v147 = vld [vmem:[#allocation5 + $0x330] sm:$0xff]
    %v148 = vld [vmem:[#allocation5 + $0x338] sm:$0xff]
    %v149 = vld [vmem:[#allocation5 + $0x340] sm:$0xff]
    %v150 = vld [vmem:[#allocation5 + $0x348] sm:$0xff]
    %v151 = vld [vmem:[#allocation5 + $0x350] sm:$0xff]
    %v152 = vld [vmem:[#allocation5 + $0x358] sm:$0xff]
    %v153 = vld [vmem:[#allocation5 + $0x360] sm:$0xff]
    %v154 = vld [vmem:[#allocation5 + $0x368] sm:$0xff]
    %v155 = vld [vmem:[#allocation5 + $0x370] sm:$0xff]
    %v156 = vld [vmem:[#allocation5 + $0x378] sm:$0xff]
    %v157 = vld [vmem:[%s2] sm:$0x1]
    %v159 = vlaneseq
    %v160 = vshrl.u32 %v159, 7
    %v161 = vsub.s32 0, %v160
    %v162 = vrot.slane %v44, %v161
    %v163 = vlaneseq
    %v164 = vshrl.u32 %v163, 7
    %v165 = vsub.s32 1, %v164
    %v166 = vrot.slane %v44, %v165
    %v167 = vlaneseq
    %v168 = vshrl.u32 %v167, 7
    %v169 = vsub.s32 2, %v168
    %v170 = vrot.slane %v44, %v169
    %v171 = vlaneseq
    %v172 = vshrl.u32 %v171, 7
    %v173 = vsub.s32 3, %v172
    %v174 = vrot.slane %v44, %v173
    %v175 = vlaneseq
    %v176 = vshrl.u32 %v175, 7
    %v177 = vsub.s32 4, %v176
    %v178 = vrot.slane %v44, %v177
    %v179 = vlaneseq
    %v180 = vshrl.u32 %v179, 7
    %v181 = vsub.s32 5, %v180
    %v182 = vrot.slane %v44, %v181
    %v183 = vlaneseq
    %v184 = vshrl.u32 %v183, 7
    %v185 = vsub.s32 6, %v184
    %v186 = vrot.slane %v44, %v185
    %194 = vmatprep.subr.mxu0 0.0
    %195 = vmatpush1.msra.mxu0 %v45
    %196 = vmatprep.subr.mxu0 0.0
    %197 = vmatpush1.msra.mxu0 %v46
    %198 = vmatprep.subr.mxu0 0.0
    %199 = vmatpush1.msra.mxu0 %v47
    %200 = vmatprep.subr.mxu0 0.0
    %201 = vmatpush1.msra.mxu0 %v48
    %202 = vmatprep.subr.mxu0 0.0
    %203 = vmatpush1.msra.mxu0 %v49
    %204 = vmatprep.subr.mxu0 0.0
    %205 = vmatpush1.msra.mxu0 %v50
    %206 = vmatprep.subr.mxu0 0.0
    %207 = vmatpush1.msra.mxu0 %v51
    %208 = vmatprep.subr.mxu0 0.0
    %209 = vmatpush1.msra.mxu0 %v52
    %210 = vmatprep.subr.mxu0 0.0
    %211 = vmatpush1.msra.mxu0 %v53
    %212 = vmatprep.subr.mxu0 0.0
    %213 = vmatpush1.msra.mxu0 %v54
    %214 = vmatprep.subr.mxu0 0.0
    %215 = vmatpush1.msra.mxu0 %v55
    %216 = vmatprep.subr.mxu0 0.0
    %217 = vmatpush1.msra.mxu0 %v56
    %218 = vmatprep.subr.mxu0 0.0
    %219 = vmatpush1.msra.mxu0 %v57
    %220 = vmatprep.subr.mxu0 0.0
    %221 = vmatpush1.msra.mxu0 %v58
    %222 = vmatprep.subr.mxu0 0.0
    %223 = vmatpush1.msra.mxu0 %v59
    %224 = vmatprep.subr.mxu0 0.0
    %225 = vmatpush1.msra.mxu0 %v60
    %226 = vmatprep.subr.mxu0 0.0
    %227 = vmatpush1.msra.mxu0 %v61
    %228 = vmatprep.subr.mxu0 0.0
    %229 = vmatpush1.msra.mxu0 %v62
    %230 = vmatprep.subr.mxu0 0.0
    %231 = vmatpush1.msra.mxu0 %v63
    %232 = vmatprep.subr.mxu0 0.0
    %233 = vmatpush1.msra.mxu0 %v64
    %234 = vmatprep.subr.mxu0 0.0
    %235 = vmatpush1.msra.mxu0 %v65
    %236 = vmatprep.subr.mxu0 0.0
    %237 = vmatpush1.msra.mxu0 %v66
    %238 = vmatprep.subr.mxu0 0.0
    %239 = vmatpush1.msra.mxu0 %v67
    %240 = vmatprep.subr.mxu0 0.0
    %241 = vmatpush1.msra.mxu0 %v68
    %242 = vmatprep.subr.mxu0 0.0
    %243 = vmatpush1.msra.mxu0 %v69
    %244 = vmatprep.subr.mxu0 0.0
    %245 = vmatpush1.msra.mxu0 %v70
    %246 = vmatprep.subr.mxu0 0.0
    %247 = vmatpush1.msra.mxu0 %v71
    %248 = vmatprep.subr.mxu0 0.0
    %249 = vmatpush1.msra.mxu0 %v72
    %250 = vmatprep.subr.mxu0 0.0
    %251 = vmatpush1.msra.mxu0 %v73
    %252 = vmatprep.subr.mxu0 0.0
    %253 = vmatpush1.msra.mxu0 %v74
    %254 = vmatprep.subr.mxu0 0.0
    %255 = vmatpush1.msra.mxu0 %v75
    %256 = vmatprep.subr.mxu0 0.0
    %257 = vmatpush1.msra.mxu0 %v76
    %258 = vmatprep.mubr.f32.mxu0 %v166
    %259 = vmatmul.mubr.f32.gmra.mrb[0].mxu0 %v162
    %v260 = vpop.f32.mrb[0].mxu0
    %v261 = vadd.f32 %v157, %v260
    %v262 = vpop.f32.mrb[0].mxu0
    %263 = vdwg.mxu0
    %264 = vmatprep.subr.mxu0 0.0
    %265 = vmatpush1.msra.mxu0 %v77
    %266 = vmatprep.subr.mxu0 0.0
    %267 = vmatpush1.msra.mxu0 %v78
    %268 = vmatprep.subr.mxu0 0.0
    %269 = vmatpush1.msra.mxu0 %v79
    %270 = vmatprep.subr.mxu0 0.0
    %271 = vmatpush1.msra.mxu0 %v80
    %272 = vmatprep.subr.mxu0 0.0
    %273 = vmatpush1.msra.mxu0 %v81
    %274 = vmatprep.subr.mxu0 0.0
    %275 = vmatpush1.msra.mxu0 %v82
    %276 = vmatprep.subr.mxu0 0.0
    %277 = vmatpush1.msra.mxu0 %v83
    %278 = vmatprep.subr.mxu0 0.0
    %279 = vmatpush1.msra.mxu0 %v84
    %280 = vmatprep.subr.mxu0 0.0
    %281 = vmatpush1.msra.mxu0 %v85
    %282 = vmatprep.subr.mxu0 0.0
    %283 = vmatpush1.msra.mxu0 %v86
    %284 = vmatprep.subr.mxu0 0.0
    %285 = vmatpush1.msra.mxu0 %v87
    %286 = vmatprep.subr.mxu0 0.0
    %287 = vmatpush1.msra.mxu0 %v88
    %288 = vmatprep.subr.mxu0 0.0
    %289 = vmatpush1.msra.mxu0 %v89
    %290 = vmatprep.subr.mxu0 0.0
    %291 = vmatpush1.msra.mxu0 %v90
    %292 = vmatprep.subr.mxu0 0.0
    %293 = vmatpush1.msra.mxu0 %v91
    %294 = vmatprep.subr.mxu0 0.0
    %295 = vmatpush1.msra.mxu0 %v92
    %296 = vmatprep.subr.mxu0 0.0
    %297 = vmatpush1.msra.mxu0 %v93
    %298 = vmatprep.subr.mxu0 0.0
    %299 = vmatpush1.msra.mxu0 %v94
    %300 = vmatprep.subr.mxu0 0.0
    %301 = vmatpush1.msra.mxu0 %v95
    %302 = vmatprep.subr.mxu0 0.0
    %303 = vmatpush1.msra.mxu0 %v96
    %304 = vmatprep.subr.mxu0 0.0
    %305 = vmatpush1.msra.mxu0 %v97
    %306 = vmatprep.subr.mxu0 0.0
    %307 = vmatpush1.msra.mxu0 %v98
    %308 = vmatprep.subr.mxu0 0.0
    %309 = vmatpush1.msra.mxu0 %v99
    %310 = vmatprep.subr.mxu0 0.0
    %311 = vmatpush1.msra.mxu0 %v100
    %312 = vmatprep.subr.mxu0 0.0
    %313 = vmatpush1.msra.mxu0 %v101
    %314 = vmatprep.subr.mxu0 0.0
    %315 = vmatpush1.msra.mxu0 %v102
    %316 = vmatprep.subr.mxu0 0.0
    %317 = vmatpush1.msra.mxu0 %v103
    %318 = vmatprep.subr.mxu0 0.0
    %319 = vmatpush1.msra.mxu0 %v104
    %320 = vmatprep.subr.mxu0 0.0
    %321 = vmatpush1.msra.mxu0 %v105
    %322 = vmatprep.subr.mxu0 0.0
    %323 = vmatpush1.msra.mxu0 %v106
    %324 = vmatprep.subr.mxu0 0.0
    %325 = vmatpush1.msra.mxu0 %v107
    %326 = vmatprep.subr.mxu0 0.0
    %327 = vmatpush1.msra.mxu0 %v108
    %328 = vmatprep.mubr.f32.mxu0 %v174
    %329 = vmatmul.mubr.f32.gmra.mrb[0].mxu0 %v170
    %v330 = vpop.f32.mrb[0].mxu0
    %v331 = vadd.f32 %v261, %v330
    %v332 = vpop.f32.mrb[0].mxu0
    %333 = vdwg.mxu0
    %334 = vmatprep.subr.mxu0 0.0
    %335 = vmatpush1.msra.mxu0 %v109
    %336 = vmatprep.subr.mxu0 0.0
    %337 = vmatpush1.msra.mxu0 %v110
    %338 = vmatprep.subr.mxu0 0.0
    %339 = vmatpush1.msra.mxu0 %v111
    %340 = vmatprep.subr.mxu0 0.0
    %341 = vmatpush1.msra.mxu0 %v112
    %342 = vmatprep.subr.mxu0 0.0
    %343 = vmatpush1.msra.mxu0 %v113
    %344 = vmatprep.subr.mxu0 0.0
    %345 = vmatpush1.msra.mxu0 %v114
    %346 = vmatprep.subr.mxu0 0.0
    %347 = vmatpush1.msra.mxu0 %v115
    %348 = vmatprep.subr.mxu0 0.0
    %349 = vmatpush1.msra.mxu0 %v116
    %350 = vmatprep.subr.mxu0 0.0
    %351 = vmatpush1.msra.mxu0 %v117
    %352 = vmatprep.subr.mxu0 0.0
    %353 = vmatpush1.msra.mxu0 %v118
    %354 = vmatprep.subr.mxu0 0.0
    %355 = vmatpush1.msra.mxu0 %v119
    %356 = vmatprep.subr.mxu0 0.0
    %357 = vmatpush1.msra.mxu0 %v120
    %358 = vmatprep.subr.mxu0 0.0
    %359 = vmatpush1.msra.mxu0 %v121
    %360 = vmatprep.subr.mxu0 0.0
    %361 = vmatpush1.msra.mxu0 %v122
    %362 = vmatprep.subr.mxu0 0.0
    %363 = vmatpush1.msra.mxu0 %v123
    %364 = vmatprep.subr.mxu0 0.0
    %365 = vmatpush1.msra.mxu0 %v124
    %366 = vmatprep.subr.mxu0 0.0
    %367 = vmatpush1.msra.mxu0 %v125
    %368 = vmatprep.subr.mxu0 0.0
    %369 = vmatpush1.msra.mxu0 %v126
    %370 = vmatprep.subr.mxu0 0.0
    %371 = vmatpush1.msra.mxu0 %v127
    %372 = vmatprep.subr.mxu0 0.0
    %373 = vmatpush1.msra.mxu0 %v128
    %374 = vmatprep.subr.mxu0 0.0
    %375 = vmatpush1.msra.mxu0 %v129
    %376 = vmatprep.subr.mxu0 0.0
    %377 = vmatpush1.msra.mxu0 %v130
    %378 = vmatprep.subr.mxu0 0.0
    %379 = vmatpush1.msra.mxu0 %v131
    %380 = vmatprep.subr.mxu0 0.0
    %381 = vmatpush1.msra.mxu0 %v132
    %382 = vmatprep.subr.mxu0 0.0
    %383 = vmatpush1.msra.mxu0 %v133
    %384 = vmatprep.subr.mxu0 0.0
    %385 = vmatpush1.msra.mxu0 %v134
    %386 = vmatprep.subr.mxu0 0.0
    %387 = vmatpush1.msra.mxu0 %v135
    %388 = vmatprep.subr.mxu0 0.0
    %389 = vmatpush1.msra.mxu0 %v136
    %390 = vmatprep.subr.mxu0 0.0
    %391 = vmatpush1.msra.mxu0 %v137
    %392 = vmatprep.subr.mxu0 0.0
    %393 = vmatpush1.msra.mxu0 %v138
    %394 = vmatprep.subr.mxu0 0.0
    %395 = vmatpush1.msra.mxu0 %v139
    %396 = vmatprep.subr.mxu0 0.0
    %397 = vmatpush1.msra.mxu0 %v140
    %398 = vmatprep.mubr.f32.mxu0 %v182
    %399 = vmatmul.mubr.f32.gmra.mrb[0].mxu0 %v178
    %v400 = vpop.f32.mrb[0].mxu0
    %v401 = vadd.f32 %v331, %v400
    %v402 = vpop.f32.mrb[0].mxu0
    %403 = vdwg.mxu0
    %404 = vmatprep.subr.mxu0 0.0
    %405 = vmatpush1.msra.mxu0 %v141
    %406 = vmatprep.subr.mxu0 0.0
    %407 = vmatpush1.msra.mxu0 %v142
    %408 = vmatprep.subr.mxu0 0.0
    %409 = vmatpush1.msra.mxu0 %v143
    %410 = vmatprep.subr.mxu0 0.0
    %411 = vmatpush1.msra.mxu0 %v144
    %412 = vmatprep.subr.mxu0 0.0
    %413 = vmatpush1.msra.mxu0 %v145
    %414 = vmatprep.subr.mxu0 0.0
    %415 = vmatpush1.msra.mxu0 %v146
    %416 = vmatprep.subr.mxu0 0.0
    %417 = vmatpush1.msra.mxu0 %v147
    %418 = vmatprep.subr.mxu0 0.0
    %419 = vmatpush1.msra.mxu0 %v148
    %420 = vmatprep.subr.mxu0 0.0
    %421 = vmatpush1.msra.mxu0 %v149
    %422 = vmatprep.subr.mxu0 0.0
    %423 = vmatpush1.msra.mxu0 %v150
    %424 = vmatprep.subr.mxu0 0.0
    %425 = vmatpush1.msra.mxu0 %v151
    %426 = vmatprep.subr.mxu0 0.0
    %427 = vmatpush1.msra.mxu0 %v152
    %428 = vmatprep.subr.mxu0 0.0
    %429 = vmatpush1.msra.mxu0 %v153
    %430 = vmatprep.subr.mxu0 0.0
    %431 = vmatpush1.msra.mxu0 %v154
    %432 = vmatprep.subr.mxu0 0.0
    %433 = vmatpush1.msra.mxu0 %v155
    %434 = vmatprep.subr.mxu0 0.0
    %435 = vmatpush1.msra.mxu0 %v156
    %436 = vmatprep.subr.mxu0 0.0
    %437 = vmatpush1.msra.mxu0 0.0
    %438 = vmatprep.subr.mxu0 0.0
    %439 = vmatpush1.msra.mxu0 0.0
    %440 = vmatprep.subr.mxu0 0.0
    %441 = vmatpush1.msra.mxu0 0.0
    %442 = vmatprep.subr.mxu0 0.0
    %443 = vmatpush1.msra.mxu0 0.0
    %444 = vmatprep.subr.mxu0 0.0
    %445 = vmatpush1.msra.mxu0 0.0
    %446 = vmatprep.subr.mxu0 0.0
    %447 = vmatpush1.msra.mxu0 0.0
    %448 = vmatprep.subr.mxu0 0.0
    %449 = vmatpush1.msra.mxu0 0.0
    %450 = vmatprep.subr.mxu0 0.0
    %451 = vmatpush1.msra.mxu0 0.0
    %452 = vmatprep.subr.mxu0 0.0
    %453 = vmatpush1.msra.mxu0 0.0
    %454 = vmatprep.subr.mxu0 0.0
    %455 = vmatpush1.msra.mxu0 0.0
    %456 = vmatprep.subr.mxu0 0.0
    %457 = vmatpush1.msra.mxu0 0.0
    %458 = vmatprep.subr.mxu0 0.0
    %459 = vmatpush1.msra.mxu0 0.0
    %460 = vmatprep.subr.mxu0 0.0
    %461 = vmatpush1.msra.mxu0 0.0
    %462 = vmatprep.subr.mxu0 0.0
    %463 = vmatpush1.msra.mxu0 0.0
    %464 = vmatprep.subr.mxu0 0.0
    %465 = vmatpush1.msra.mxu0 0.0
    %466 = vmatprep.subr.mxu0 0.0
    %467 = vmatpush1.msra.mxu0 0.0
    %468 = vmatprep.mubr.f32.mxu0 0.0
    %469 = vmatmul.mubr.f32.gmra.mrb[0].mxu0 %v186
    %v470 = vpop.f32.mrb[0].mxu0
    %v471 = vadd.f32 %v401, %v470
    %v472 = vpop.f32.mrb[0].mxu0
    %473 = vdwg.mxu0
    %vm474 = vcmask 1040384
    %v475 = vsel %vm474, %v471, -inf
    %476 = vmax.xlane.f32.xlu0 %v475
    %v477 = vpop.xlane.xlu0 %476
    %v478 = vsub.f32 %v471, %v477
    %v479 = vmul.f32 %v478, 1.442695
    %v480 = vpow.pop %v479
    %v481 = vsel %vm474, %v480, 0.0
    %482 = vadd.xlane.f32.xlu0 %v481
    %v483 = vpop.xlane.xlu0 %482
    %v484 = vlog2.pop %v483
    %v485 = vmul.f32 %v484, 0.6931472
    %v486 = vsub.f32 %v478, %v485
    %v487 = vld [vmem:[%s3] sm:$0x1]
    %v488 = vadd.f32 %v486, %v487
    %v489 = vsel %vm474, %v488, -inf
    %490 = vmax.xlane.f32.xlu0 %v489
    %v491 = vpop.xlane.xlu0 %490
    %v492 = vlaneseq
    %v493 = vand.u32 %v492, 127
    %vm494 = vcmp.ge.f32.partialorder %v488, %v491
    %v495 = vsel %vm494, %v493, 2147483647
    %v496 = vsel %vm474, %v495, 2147483647
    %v497 = vand.u32 %v496, 65535
    %v498 = vshra.s32 %v496, 16
    %v499 = vcvt.s32.f32 %v497
    %v500 = vcvt.s32.f32 %v498
    %501 = vmin.xlane.f32.xlu0 %v500
    %v502 = vpop.xlane.xlu0 %501
    %vm503 = vcmp.eq.f32.partialorder %v500, %v502
    %v504 = vsel %vm503, %v499, inf
    %505 = vmin.xlane.f32.xlu0 %v504
    %v506 = vpop.xlane.xlu0 %505
    %v507 = vcvt.f32.s32 %v506
    %v508 = vcvt.f32.s32 %v502
    %v509 = vshll.u32 %v508, 16
    %v510 = vadd.s32 %v509, %v507
    %vm511 = vcmask 0
    %512 = vst.msk [vmem:[#allocation7] sm:$0x1] %vm511, %v510
    // Predicated region
    $region26: #{actor_forward.1} parent=1 // pred_check
      _
    $region27: #{actor_forward.1} parent=1 // pred_check_branch
      %514 = sbr.rel (0) target = $region29
    $region28: #{actor_forward.1} parent=1 // pred_region
      %s516 = ssub.s32 16, 16
      %517 = vsyncadd [#allocation4], %s516
      %s519 = sshll.u32 [#allocation7], 4
      %s520 = int_to_ptr.vmem [resolvable:$true] %s519
      %522 = dma.vmem_to_hbm [thread:$0]  %s520, 16, %s4, [#allocation4]
    $region29: #{actor_forward.1} parent=1 // pred_fallthru
      _
    // Predicated region
    $region30: #{actor_forward.1} parent=1 // pred_check
      _
    $region31: #{actor_forward.1} parent=1 // pred_check_branch
      %524 = sbr.rel (0) target = $region33
    $region32: #{actor_forward.1} parent=1 // pred_region
      %525 = dma.done [#allocation4], 16
    $region33: #{actor_forward.1} parent=1 // pred_fallthru
      _
    %526 = vsyncpa [#allocation3], 1
    %527 = vsyncpa [#allocation6], 1
    %528 = vsyncpa [#allocation4], 1

</llo_original>
